<compile_context>
chip_gen: v7x
topology: tpu7x:2x2x1
jax: 0.10.0
libtpu: 0.0.40
codegen_flags: <defaults>
</compile_context>

<pallas_src>
import functools
import math

import jax
import jax.numpy as jnp
from jax.experimental import pallas as pl
from jax.experimental.pallas import tpu as pltpu

# > v5e's 16 MiB default scoped VMEM, comfortably < v7x's 64 MiB physical VMEM.
_VMEM_LIMIT_BYTES = 32 * 1024 * 1024
# HBM-gather-path buffer budget: 2x out block + 2x landing buffer = 4*tb*emb*B.
_BUF_BUDGET_BYTES = 24 * 1024 * 1024
# Fast-path budget: 2x table + 2x out block + one-hot temp + ids.
_FAST_PATH_BUDGET_BYTES = 20 * 1024 * 1024


def _vmem_table_kernel(ids_ref, table_ref, out_ref, *, scale):
    """Fast path: table resident in VMEM; gather via one-hot @ table (MXU)."""
    tb = out_ref.shape[0]
    vocab = table_ref.shape[0]
    ids = ids_ref[...]                                           # (tb, 1) int32
    iota = jax.lax.broadcasted_iota(jnp.int32, (tb, vocab), 1)   # (tb, vocab)
    onehot = jnp.where(ids == iota, 1.0, 0.0).astype(table_ref.dtype)
    rows = jnp.dot(onehot, table_ref[...], preferred_element_type=jnp.float32)
    out_ref[...] = (rows * scale).astype(out_ref.dtype)


def _hbm_gather_kernel(ids_ref, table_hbm, out_ref, buf, sem, *,
                       token_block, scale):
    # ids_ref:   (n_pad,)               int32, SMEM (scalar prefetch)
    # table_hbm: (vocab, emb)           embedding table, left in HBM (pl.ANY)
    # out_ref:   (token_block, emb)     output block, VMEM
    # buf:       (2, token_block, emb)  double-buffered gather landing pad
    # sem:       (2,) DMA semaphores, one per landing slot
    i = pl.program_id(0)
    n_blocks = pl.num_programs(0)

    def issue_block(block, slot):
        base = block * token_block
        # Fully unrolled: back-to-back descriptor pushes, SMEM id read feeding
        # each one directly.  All token_block row copies run concurrently.
        for j in range(token_block):
            row = ids_ref[base + j]
            pltpu.make_async_copy(
                table_hbm.at[pl.ds(row, 1), :],
                buf.at[slot, pl.ds(j, 1), :],
                sem.at[slot],
            ).start()

    # Prime the pipeline on the first grid step: block 0 -> slot 0.
    @pl.when(i == 0)
    def _():
        issue_block(0, 0)

    # Prefetch the next block into the other slot while this block's copies
    # complete and its output is scaled / written back.
    @pl.when(i + 1 < n_blocks)
    def _():
        issue_block(i + 1, (i + 1) % 2)

    # Single aggregate wait: DMA semaphores count bytes, so one wait descriptor
    # covering the whole landing slot (token_block * emb * itemsize bytes)
    # matches the sum of the token_block equal-sized row copies on this slot.
    slot = i % 2
    pltpu.make_async_copy(buf.at[slot], buf.at[slot], sem.at[slot]).wait()

    # The only VPU work: sqrt(emb_size) scale, then emit the lane-dense block.
    out_ref[...] = (buf[slot] * scale).astype(out_ref.dtype)


def token_embedding(tokens, table, *, token_block=256, force_hbm_gather=False):
    """tokens: int array of any shape; table: (vocab_size, emb_size) floats.

    Returns table[tokens] * sqrt(emb_size), shape tokens.shape + (emb_size,).
    """
    vocab_size, emb_size = table.shape
    scale = math.sqrt(emb_size)
    out_dtype = table.dtype
    itemsize = jnp.dtype(table.dtype).itemsize
    orig_shape = tuple(tokens.shape)

    flat = tokens.reshape(-1).astype(jnp.int32)
    # PyTorch nn.Embedding raises on out-of-range ids; clamp so an invalid id
    # can never drive an out-of-bounds HBM DMA / one-hot row.
    flat = jnp.clip(flat, 0, vocab_size - 1)
    n = int(flat.shape[0])
    if n == 0:
        return jnp.zeros(orig_shape + (emb_size,), out_dtype)

    # --- pick token_block: multiple of 8, capped by the VMEM buffer budget ---
    tb = max(8, min(int(token_block), 512))
    tb -= tb % 8
    tb = min(tb, ((n + 7) // 8) * 8)            # no bigger than the token count
    while tb > 8 and 4 * tb * emb_size * itemsize > _BUF_BUDGET_BYTES:
        tb = max(8, (tb // 2) - ((tb // 2) % 8))

    n_pad = pl.cdiv(n, tb) * tb
    if n_pad != n:
        # Padded ids gather row 0; their rows are sliced off afterwards.
        flat = jnp.concatenate([flat, jnp.zeros((n_pad - n,), jnp.int32)])
    n_blocks = n_pad // tb

    table_bytes = vocab_size * emb_size * itemsize
    fast_bytes = (2 * table_bytes                       # resident (2x buffered)
                  + 2 * tb * emb_size * itemsize        # out block, 2x buffered
                  + tb * vocab_size * 4                 # one-hot temporary
                  + 2 * tb * 4)                         # ids block
    use_fast = (not force_hbm_gather) and fast_bytes <= _FAST_PATH_BUDGET_BYTES

    if use_fast:
        kernel = functools.partial(_vmem_table_kernel, scale=scale)
        out = pl.pallas_call(
            kernel,
            out_shape=jax.ShapeDtypeStruct((n_pad, emb_size), out_dtype),
            grid=(n_blocks,),
            in_specs=[
                pl.BlockSpec((tb, 1), lambda i: (i, 0)),                 # ids
                pl.BlockSpec((vocab_size, emb_size), lambda i: (0, 0)),  # table
            ],
            out_specs=pl.BlockSpec((tb, emb_size), lambda i: (i, 0)),
            compiler_params=pltpu.CompilerParams(
                dimension_semantics=("parallel",),
                vmem_limit_bytes=_VMEM_LIMIT_BYTES),
        )(flat.reshape(n_pad, 1), table)
    else:
        kernel = functools.partial(_hbm_gather_kernel, token_block=tb,
                                   scale=scale)
        out = pl.pallas_call(
            kernel,
            out_shape=jax.ShapeDtypeStruct((n_pad, emb_size), out_dtype),
            grid_spec=pltpu.PrefetchScalarGridSpec(
                num_scalar_prefetch=1,                       # token ids -> SMEM
                grid=(n_blocks,),
                in_specs=[pl.BlockSpec(memory_space=pl.ANY)],  # table in HBM
                out_specs=pl.BlockSpec((tb, emb_size),
                                       lambda i, ids: (i, 0)),
                scratch_shapes=[
                    pltpu.VMEM((2, tb, emb_size), table.dtype),
                    pltpu.SemaphoreType.DMA((2,)),
                ],
            ),
            compiler_params=pltpu.CompilerParams(
                # Sequential: the cross-step double-buffer (primed at step 0)
                # must not be split across cores.
                dimension_semantics=("arbitrary",),
                vmem_limit_bytes=_VMEM_LIMIT_BYTES),
        )(flat, table)

    return out[:n].reshape(*orig_shape, emb_size)


if __name__ == "__main__":
    vocab_size = 64
    emb_size = 128
    batch, seq = 2, 8

    key = jax.random.PRNGKey(0)
    k_tab, k_tok = jax.random.split(key)

    # Deterministic synthetic "nn.Embedding" weight (N(0,1), PyTorch default).
    table = jax.random.normal(k_tab, (vocab_size, emb_size), dtype=jnp.float32)
    tokens = jax.random.randint(k_tok, (batch, seq), 0, vocab_size,
                                dtype=jnp.int32)

    # Reference: plain JAX gather * sqrt(emb_size).
    ref = table[tokens] * math.sqrt(emb_size)

    # 1) VMEM-resident fast path (default for this 32 KiB table), single step.
    out_fast = jax.block_until_ready(token_embedding(tokens, table))
    assert out_fast.shape == (batch, seq, emb_size)
    assert jnp.allclose(out_fast, ref, atol=1e-5), "fast path mismatch"

    # 2) Fast path, multiple grid steps.
    out_fast8 = jax.block_until_ready(
        token_embedding(tokens, table, token_block=8))
    assert jnp.allclose(out_fast8, ref, atol=1e-5), "fast path (tb=8) mismatch"

    # 3) HBM DMA-gather path (what large vocabs use), single grid step.
    out_hbm = jax.block_until_ready(
        token_embedding(tokens, table, force_hbm_gather=True))
    assert jnp.allclose(out_hbm, ref, atol=1e-5), "hbm path mismatch"

    # 4) HBM path with several grid steps -> exercises cross-step
    #    double-buffering (prime, prefetch-next, aggregate wait on both slots).
    out_hbm8 = jax.block_until_ready(
        token_embedding(tokens, table, token_block=8, force_hbm_gather=True))
    assert jnp.allclose(out_hbm8, ref, atol=1e-5), "hbm path (tb=8) mismatch"

    print("KERNEL_OK")
</pallas_src>

<mosaic_0001>
module attributes {stable_mosaic.version = 11 : i64} {
  func.func @_vmem_table_kernel(%arg0: i32, %arg1: memref<16x1xi32, #tpu.memory_space<vmem>>, %arg2: memref<64x128xf32, #tpu.memory_space<vmem>>, %arg3: memref<16x128xf32, #tpu.memory_space<vmem>>) attributes {dimension_semantics = [#tpu.dimension_semantics<parallel>], iteration_bounds = array<i64: 1>, scalar_prefetch = 0 : i64, scratch_operands = 0 : i64, tpu.core_type = #tpu.core_type<tc>, window_params = [{transform_indices = @transform_0, window_bounds = array<i64: 16, 1>}, {pipeline_mode = #tpu.pipeline_mode<synchronous>, transform_indices = @transform_1, window_bounds = array<i64: 64, 128>}, {transform_indices = @transform_2, window_bounds = array<i64: 16, 128>}]} {
    %c0 = arith.constant 0 : index
    %c0_0 = arith.constant 0 : index
    %0 = vector.load %arg1[%c0, %c0_0] : memref<16x1xi32, #tpu.memory_space<vmem>>, vector<16x1xi32>
    %1 = tpu.iota {dimensions = array<i32: 1>} : vector<16x64xi32>
    %2 = vector.broadcast %0 : vector<16x1xi32> to vector<16x64xi32>
    %3 = arith.cmpi eq, %2, %1 : vector<16x64xi32>
    %cst = arith.constant 1.000000e+00 : f32
    %cst_1 = arith.constant 0.000000e+00 : f32
    %4 = vector.broadcast %cst : f32 to vector<16x64xf32>
    %5 = vector.broadcast %cst_1 : f32 to vector<16x64xf32>
    %6 = arith.select %3, %4, %5 : vector<16x64xi1>, vector<16x64xf32>
    %c0_2 = arith.constant 0 : index
    %c0_3 = arith.constant 0 : index
    %7 = vector.load %arg2[%c0_2, %c0_3] : memref<64x128xf32, #tpu.memory_space<vmem>>, vector<64x128xf32>
    %cst_4 = arith.constant dense<0.000000e+00> : vector<16x128xf32>
    %8 = tpu.matmul %6, %7, %cst_4 {dimension_numbers = #tpu.dot_dimension_numbers<[1], [0], [0], [1], [0, 0, 1, 1], [], []>} : vector<16x64xf32>, vector<64x128xf32>, vector<16x128xf32> -> vector<16x128xf32>
    %cst_5 = arith.constant 11.3137083 : f32
    %9 = vector.broadcast %cst_5 : f32 to vector<16x128xf32>
    %10 = arith.mulf %8, %9 : vector<16x128xf32>
    %c0_6 = arith.constant 0 : index
    %c0_7 = arith.constant 0 : index
    %11 = vector.load %arg3[%c0_6, %c0_7] : memref<16x128xf32, #tpu.memory_space<vmem>>, vector<16x128xf32>
    tpu.vector_store %arg3[%c0_6, %c0_7], %10 {strides = array<i32>} : memref<16x128xf32, #tpu.memory_space<vmem>>, vector<16x128xf32>,
    return
  }
  func.func @transform_0(%arg0: i32) -> (i32, i32) {
    %c0_i32 = arith.constant 0 : i32
    %c0_i32_0 = arith.constant 0 : i32
    return %arg0, %c0_i32 : i32, i32
  }
  func.func @transform_1(%arg0: i32) -> (i32, i32) {
    %c0_i32 = arith.constant 0 : i32
    %c0_i32_0 = arith.constant 0 : i32
    %c0_i32_1 = arith.constant 0 : i32
    return %c0_i32, %c0_i32_0 : i32, i32
  }
  func.func @transform_2(%arg0: i32) -> (i32, i32) {
    %c0_i32 = arith.constant 0 : i32
    %c0_i32_0 = arith.constant 0 : i32
    return %arg0, %c0_i32 : i32, i32
  }
}

</mosaic_0001>

<llo_original>
// kernel: tpu_custom_call.1
$region0: #{tpu_custom_call.1}
  #allocation0 [shape = 'u32[]', space=smem, size = 0x4, offset = 0x4, fixed_abs, tag = 'smem constant byte address 0x4 - core index']
  #allocation1 [shape = 'u32[144,128]{1,0:T(1,128)}', space=vmem, size = 0x12000, scoped, tag = 'internal scratch']
  %s0 = inlined_call_operand.vmem [shape: s32[16,1], index: 0, kind: input, shape index: {}]
  %s1 = inlined_call_operand.hbm [shape: f32[64,128], index: 1, kind: input, shape index: {}]
  %s2 = inlined_call_operand.hbm [shape: f32[16,128], index: 2, kind: output, shape index: {}]
  %s3 = sld [smem:[#allocation0]]
  $region22: #{tpu_custom_call.1} parent=0
    _
  %s5 = ssub.s32 1, %s3
  %s6 = scalar_select 0, %s5, %s3
  $region1: #{tpu_custom_call.1} parent=0
    #allocation2 [shape = 'u8[32768]{0}', space=vmem, size = 0x8000, scoped, tag = 'input window, operand 1, single buffered']
    #allocation3 [shape = 's32[1]{0}', space=sflag, size = 0x4, scoped, tag = 'scoped memory for tpu_custom_call.1']
    #allocation4 [shape = 's32[1]{0}', space=sflag, size = 0x4, scoped, tag = 'scoped memory for tpu_custom_call.1']
    #allocation5 [shape = 'u8[8192]{0}', space=vmem, size = 0x2000, scoped, tag = 'output window, operand 0, single buffered']
    %7 = vsyncpa [#allocation3], 0
    %8 = vsyncpa [#allocation4], 0
    // Predicated region
    $region2: #{tpu_custom_call.1} parent=1 // pred_check
      _
    $region3: #{tpu_custom_call.1} parent=1 // pred_check_branch
      %10 = sbr.rel (0) target = $region5
    $region4: #{tpu_custom_call.1} parent=1 // pred_region
      _
    $region5: #{tpu_custom_call.1} parent=1 // pred_fallthru
      _
    // Predicated region
    $region6: #{tpu_custom_call.1} parent=1 // pred_check
      _
    $region7: #{tpu_custom_call.1} parent=1 // pred_check_branch
      %12 = sbr.rel (0) target = $region9
    $region8: #{tpu_custom_call.1} parent=1 // pred_region
      %s14 = ssub.s32 1024, 1024
      %15 = vsyncadd [#allocation3], %s14
      %s16 = sshll.u32 [#allocation2], 4
      %s17 = int_to_ptr.vmem [resolvable:$true] %s16
      %22 = dma.hbm_to_vmem [thread:$0]  %s1, 1024, %s17, [#allocation3], 128, 128, 8
    $region9: #{tpu_custom_call.1} parent=1 // pred_fallthru
      _
    // Predicated region
    $region10: #{tpu_custom_call.1} parent=1 // pred_check
      _
    $region11: #{tpu_custom_call.1} parent=1 // pred_check_branch
      %24 = sbr.rel (0) target = $region13
    $region12: #{tpu_custom_call.1} parent=1 // pred_region
      %25 = dma.done [#allocation3], 1024
    $region13: #{tpu_custom_call.1} parent=1 // pred_fallthru
      _
    %v26 = vld [vmem:[%s0] sm:$0xff]
    %v27 = vld [vmem:[%s0 + $0x8] sm:$0xff]
    %v28 = vlaneseq
    %v29 = vand.u32 %v28, 127
    %30 = vset.pattern.permute.xlu0 0
    %31 = vperm.xlu0 %30, %v26
    %v32 = vpop.permute.xlu0 %31
    %33 = vset.pattern.permute.xlu0 0
    %34 = vperm.xlu0 %33, %v27
    %v35 = vpop.permute.xlu0 %34
    %vm36 = vcmp.eq.s32.totalorder %v32, %v29
    %vm37 = vcmp.eq.s32.totalorder %v35, %v29
    %v38 = vsel %vm36, 1.0, 0.0
    %v39 = vsel %vm37, 1.0, 0.0
    %v40 = vld [vmem:[#allocation2] sm:$0xff]
    %v41 = vld [vmem:[#allocation2 + $0x8] sm:$0xff]
    %v42 = vld [vmem:[#allocation2 + $0x10] sm:$0xff]
    %v43 = vld [vmem:[#allocation2 + $0x18] sm:$0xff]
    %v44 = vld [vmem:[#allocation2 + $0x20] sm:$0xff]
    %v45 = vld [vmem:[#allocation2 + $0x28] sm:$0xff]
    %v46 = vld [vmem:[#allocation2 + $0x30] sm:$0xff]
    %v47 = vld [vmem:[#allocation2 + $0x38] sm:$0xff]
    %vm48 = vcmask 523264
    %v50 = vsel %vm48, %v38, 0
    %v53 = vsel %vm48, %v39, 0
    %55 = vmatprep.subr.mxu0 0.0
    %56 = vmatpush1.msra.mxu0 %v40
    %57 = vmatprep.subr.mxu0 0.0
    %58 = vmatpush1.msra.mxu0 %v41
    %59 = vmatprep.subr.mxu0 0.0
    %60 = vmatpush1.msra.mxu0 %v42
    %61 = vmatprep.subr.mxu0 0.0
    %62 = vmatpush1.msra.mxu0 %v43
    %63 = vmatprep.subr.mxu0 0.0
    %64 = vmatpush1.msra.mxu0 %v44
    %65 = vmatprep.subr.mxu0 0.0
    %66 = vmatpush1.msra.mxu0 %v45
    %67 = vmatprep.subr.mxu0 0.0
    %68 = vmatpush1.msra.mxu0 %v46
    %69 = vmatprep.subr.mxu0 0.0
    %70 = vmatpush1.msra.mxu0 %v47
    %71 = vmatprep.subr.mxu0 0.0
    %72 = vmatpush1.msra.mxu0 0.0
    %73 = vmatprep.subr.mxu0 0.0
    %74 = vmatpush1.msra.mxu0 0.0
    %75 = vmatprep.subr.mxu0 0.0
    %76 = vmatpush1.msra.mxu0 0.0
    %77 = vmatprep.subr.mxu0 0.0
    %78 = vmatpush1.msra.mxu0 0.0
    %79 = vmatprep.subr.mxu0 0.0
    %80 = vmatpush1.msra.mxu0 0.0
    %81 = vmatprep.subr.mxu0 0.0
    %82 = vmatpush1.msra.mxu0 0.0
    %83 = vmatprep.subr.mxu0 0.0
    %84 = vmatpush1.msra.mxu0 0.0
    %85 = vmatprep.subr.mxu0 0.0
    %86 = vmatpush1.msra.mxu0 0.0
    %87 = vmatprep.subr.mxu0 0.0
    %88 = vmatpush1.msra.mxu0 0.0
    %89 = vmatprep.subr.mxu0 0.0
    %90 = vmatpush1.msra.mxu0 0.0
    %91 = vmatprep.subr.mxu0 0.0
    %92 = vmatpush1.msra.mxu0 0.0
    %93 = vmatprep.subr.mxu0 0.0
    %94 = vmatpush1.msra.mxu0 0.0
    %95 = vmatprep.subr.mxu0 0.0
    %96 = vmatpush1.msra.mxu0 0.0
    %97 = vmatprep.subr.mxu0 0.0
    %98 = vmatpush1.msra.mxu0 0.0
    %99 = vmatprep.subr.mxu0 0.0
    %100 = vmatpush1.msra.mxu0 0.0
    %101 = vmatprep.subr.mxu0 0.0
    %102 = vmatpush1.msra.mxu0 0.0
    %103 = vmatprep.subr.mxu0 0.0
    %104 = vmatpush1.msra.mxu0 0.0
    %105 = vmatprep.subr.mxu0 0.0
    %106 = vmatpush1.msra.mxu0 0.0
    %107 = vmatprep.subr.mxu0 0.0
    %108 = vmatpush1.msra.mxu0 0.0
    %109 = vmatprep.subr.mxu0 0.0
    %110 = vmatpush1.msra.mxu0 0.0
    %111 = vmatprep.subr.mxu0 0.0
    %112 = vmatpush1.msra.mxu0 0.0
    %113 = vmatprep.subr.mxu0 0.0
    %114 = vmatpush1.msra.mxu0 0.0
    %115 = vmatprep.subr.mxu0 0.0
    %116 = vmatpush1.msra.mxu0 0.0
    %117 = vmatprep.subr.mxu0 0.0
    %118 = vmatpush1.msra.mxu0 0.0
    %119 = vmatprep.mubr.f32.mxu0 0.0
    %120 = vmatmul.mubr.f32.gmra.mrb[0].mxu0 %v50
    %v121 = vpop.f32.mrb[0].mxu0
    %v122 = vadd.f32 0.0, %v121
    %v123 = vpop.f32.mrb[0].mxu0
    %124 = vmatprep.mubr.f32.mxu0 0.0
    %125 = vmatmul.mubr.f32.gmra.mrb[0].mxu0 %v53
    %v126 = vpop.f32.mrb[0].mxu0
    %v127 = vadd.f32 0.0, %v126
    %v128 = vpop.f32.mrb[0].mxu0
    %129 = vdwg.mxu0
    %v130 = vmul.f32 %v122, 11.313708
    %v131 = vmul.f32 %v127, 11.313708
    %132 = vst [vmem:[#allocation5] sm:$0xff] %v130
    %133 = vst [vmem:[#allocation5 + $0x8] sm:$0xff] %v131
    // Predicated region
    $region14: #{tpu_custom_call.1} parent=1 // pred_check
      _
    $region15: #{tpu_custom_call.1} parent=1 // pred_check_branch
      %135 = sbr.rel (0) target = $region17
    $region16: #{tpu_custom_call.1} parent=1 // pred_region
      %s137 = ssub.s32 256, 256
      %138 = vsyncadd [#allocation4], %s137
      %s139 = sshll.u32 [#allocation5], 4
      %s140 = int_to_ptr.vmem [resolvable:$true] %s139
      %145 = dma.vmem_to_hbm [thread:$0]  %s140, 256, %s2, [#allocation4], 128, 128, 8
    $region17: #{tpu_custom_call.1} parent=1 // pred_fallthru
      _
    // Predicated region
    $region18: #{tpu_custom_call.1} parent=1 // pred_check
      _
    $region19: #{tpu_custom_call.1} parent=1 // pred_check_branch
      %147 = sbr.rel (0) target = $region21
    $region20: #{tpu_custom_call.1} parent=1 // pred_region
      %148 = dma.done [#allocation4], 256
    $region21: #{tpu_custom_call.1} parent=1 // pred_fallthru
      _
    %149 = vsyncpa [#allocation3], 1
    %150 = vsyncpa [#allocation4], 1

</llo_original>
